<compile_context>
chip_gen: v5e
topology: v5e:2x2
jax: 0.10.0
libtpu: 0.0.40
codegen_flags: <defaults>
</compile_context>

<pallas_src>
import functools

import jax
import jax.numpy as jnp
from jax.experimental import pallas as pl
from jax.experimental.pallas import tpu as pltpu


def actor_kernel(x_ref,
                 w1_ref, b1_ref,
                 w2_ref, b2_ref,
                 w3_ref, b3_ref,
                 wo_ref, bo_ref,
                 out_ref, *, max_action):
    # MXU matmuls take bf16 operands with f32 accumulation; all element-wise
    # math (bias add, relu, tanh, scale) stays in f32.
    x = x_ref[...].astype(jnp.bfloat16)

    h = jnp.dot(x, w1_ref[...], preferred_element_type=jnp.float32) + b1_ref[...]
    h = jnp.maximum(h, 0.0)

    h = jnp.dot(h.astype(jnp.bfloat16), w2_ref[...],
                preferred_element_type=jnp.float32) + b2_ref[...]
    h = jnp.maximum(h, 0.0)

    h = jnp.dot(h.astype(jnp.bfloat16), w3_ref[...],
                preferred_element_type=jnp.float32) + b3_ref[...]
    h = jnp.maximum(h, 0.0)

    a = jnp.dot(h.astype(jnp.bfloat16), wo_ref[...],
                preferred_element_type=jnp.float32) + bo_ref[...]
    out_ref[...] = (max_action * jnp.tanh(a)).astype(out_ref.dtype)


def actor_forward(x, params, max_action):
    """x: (B, obs+goal) float32. params: dict of f32 weights/biases (in, out)
    layout. Returns (B, action) float32."""
    batch, in_dim = x.shape
    action_dim = params["wo"].shape[1]

    # bf16 weights for the MXU / to halve the weight-DMA bytes; f32 biases.
    w1 = params["w1"].astype(jnp.bfloat16)
    w2 = params["w2"].astype(jnp.bfloat16)
    w3 = params["w3"].astype(jnp.bfloat16)
    wo = params["wo"].astype(jnp.bfloat16)
    b1, b2, b3, bo = params["b1"], params["b2"], params["b3"], params["bo"]

    # Pad the output (and last layer) to a lane-dense width so the final
    # store is an unmasked vst; slice back in the wrapper.
    out_pad = max(128, ((action_dim + 127) // 128) * 128)
    if out_pad != action_dim:
        wo = jnp.pad(wo, ((0, 0), (0, out_pad - action_dim)))
        bo = jnp.pad(bo, ((0, 0), (0, out_pad - action_dim)))

    # Batch tile: one sublane-aligned tile for small batches, 256-row tiles
    # pipelined across a grid for large ones.
    tb = 256 if batch >= 256 else max(8, ((batch + 7) // 8) * 8)
    padded_batch = ((batch + tb - 1) // tb) * tb
    if padded_batch != batch:
        x = jnp.pad(x, ((0, padded_batch - batch), (0, 0)))
    grid = (padded_batch // tb,)

    kernel = functools.partial(actor_kernel, max_action=float(max_action))

    # Weights / biases stay VMEM-resident across all batch tiles.
    def resident(shape):
        return pl.BlockSpec(shape, lambda i: (0,) * len(shape))

    out = pl.pallas_call(
        kernel,
        out_shape=jax.ShapeDtypeStruct((padded_batch, out_pad), jnp.float32),
        grid=grid,
        in_specs=[
            pl.BlockSpec((tb, in_dim), lambda i: (i, 0)),
            resident(w1.shape), resident(b1.shape),
            resident(w2.shape), resident(b2.shape),
            resident(w3.shape), resident(b3.shape),
            resident(wo.shape), resident(bo.shape),
        ],
        out_specs=pl.BlockSpec((tb, out_pad), lambda i: (i, 0)),
        compiler_params=pltpu.CompilerParams(
            dimension_semantics=("parallel",)),
    )(x, w1, b1, w2, b2, w3, b3, wo, bo)

    return out[:batch, :action_dim]


def init_actor_params(key, obs_dim, goal_dim, action_dim, hidden=256,
                      residual=False):
    """Deterministic synthetic init. Weights stored as (in, out), f32."""
    in_dim = obs_dim + goal_dim
    dims = [(in_dim, hidden), (hidden, hidden), (hidden, hidden),
            (hidden, action_dim)]
    names = ["1", "2", "3", "o"]
    params = {}
    for (din, dout), n in zip(dims, names):
        key, kw, kb = jax.random.split(key, 3)
        bound = 1.0 / jnp.sqrt(din)  # mimic PyTorch Linear default init range
        params["w" + n] = jax.random.uniform(kw, (din, dout), jnp.float32,
                                             minval=-bound, maxval=bound)
        params["b" + n] = jax.random.uniform(kb, (1, dout), jnp.float32,
                                             minval=-bound, maxval=bound)
    if residual:
        params["wo"] = jnp.zeros_like(params["wo"])
        params["bo"] = jnp.zeros_like(params["bo"])
    return params


def actor_reference(x, params, max_action):
    """Plain JAX reference using the same bf16-operand / f32-accumulate
    matmul recipe as the kernel."""
    def lin(h, w, b):
        return jnp.dot(h.astype(jnp.bfloat16), w.astype(jnp.bfloat16),
                       preferred_element_type=jnp.float32) + b
    h = jnp.maximum(lin(x, params["w1"], params["b1"]), 0.0)
    h = jnp.maximum(lin(h, params["w2"], params["b2"]), 0.0)
    h = jnp.maximum(lin(h, params["w3"], params["b3"]), 0.0)
    return max_action * jnp.tanh(lin(h, params["wo"], params["bo"]))


if __name__ == "__main__":
    # Small env: obs=10, goal=3, action=4, action_max=1.0 (HER/fetch-like).
    env_params = {"obs": 10, "goal": 3, "action": 4, "action_max": 1.0}
    in_dim = env_params["obs"] + env_params["goal"]

    key = jax.random.PRNGKey(0)
    key, kx = jax.random.split(key)
    params = init_actor_params(key, env_params["obs"], env_params["goal"],
                               env_params["action"], residual=False)

    # 1) Tiny batch (single grid step, padded to one sublane).
    batch = 2
    x_small = jax.random.normal(kx, (batch, in_dim), dtype=jnp.float32)
    out_small = jax.block_until_ready(
        actor_forward(x_small, params, env_params["action_max"]))
    ref_small = actor_reference(x_small, params, env_params["action_max"])
    assert out_small.shape == (batch, env_params["action"])
    assert jnp.allclose(out_small, ref_small, atol=1e-3, rtol=1e-3), \
        "mismatch vs reference (small batch)"

    # 2) Larger batch exercising the batch grid (tb=256, padded, 2 steps).
    key, kx2 = jax.random.split(key)
    big = 300
    x_big = jax.random.normal(kx2, (big, in_dim), dtype=jnp.float32)
    out_big = jax.block_until_ready(
        actor_forward(x_big, params, env_params["action_max"]))
    ref_big = actor_reference(x_big, params, env_params["action_max"])
    assert out_big.shape == (big, env_params["action"])
    assert jnp.allclose(out_big, ref_big, atol=1e-3, rtol=1e-3), \
        "mismatch vs reference (large batch)"

    print("KERNEL_OK")
</pallas_src>

<mosaic_0001>
module attributes {stable_mosaic.version = 11 : i64} {
  func.func @actor_kernel(%arg0: i32, %arg1: memref<8x13xf32, #tpu.memory_space<vmem>>, %arg2: memref<13x256xbf16, #tpu.memory_space<vmem>>, %arg3: memref<1x256xf32, #tpu.memory_space<vmem>>, %arg4: memref<256x256xbf16, #tpu.memory_space<vmem>>, %arg5: memref<1x256xf32, #tpu.memory_space<vmem>>, %arg6: memref<256x256xbf16, #tpu.memory_space<vmem>>, %arg7: memref<1x256xf32, #tpu.memory_space<vmem>>, %arg8: memref<256x128xbf16, #tpu.memory_space<vmem>>, %arg9: memref<1x128xf32, #tpu.memory_space<vmem>>, %arg10: memref<8x128xf32, #tpu.memory_space<vmem>>) attributes {dimension_semantics = [#tpu.dimension_semantics<parallel>], iteration_bounds = array<i64: 1>, scalar_prefetch = 0 : i64, scratch_operands = 0 : i64, tpu.core_type = #tpu.core_type<tc>, window_params = [{transform_indices = @transform_0, window_bounds = array<i64: 8, 13>}, {pipeline_mode = #tpu.pipeline_mode<synchronous>, transform_indices = @transform_1, window_bounds = array<i64: 13, 256>}, {pipeline_mode = #tpu.pipeline_mode<synchronous>, transform_indices = @transform_2, window_bounds = array<i64: 1, 256>}, {pipeline_mode = #tpu.pipeline_mode<synchronous>, transform_indices = @transform_3, window_bounds = array<i64: 256, 256>}, {pipeline_mode = #tpu.pipeline_mode<synchronous>, transform_indices = @transform_4, window_bounds = array<i64: 1, 256>}, {pipeline_mode = #tpu.pipeline_mode<synchronous>, transform_indices = @transform_5, window_bounds = array<i64: 256, 256>}, {pipeline_mode = #tpu.pipeline_mode<synchronous>, transform_indices = @transform_6, window_bounds = array<i64: 1, 256>}, {pipeline_mode = #tpu.pipeline_mode<synchronous>, transform_indices = @transform_7, window_bounds = array<i64: 256, 128>}, {pipeline_mode = #tpu.pipeline_mode<synchronous>, transform_indices = @transform_8, window_bounds = array<i64: 1, 128>}, {transform_indices = @transform_9, window_bounds = array<i64: 8, 128>}]} {
    %c0 = arith.constant 0 : index
    %c0_0 = arith.constant 0 : index
    %0 = vector.load %arg1[%c0, %c0_0] : memref<8x13xf32, #tpu.memory_space<vmem>>, vector<8x13xf32>
    %1 = arith.truncf %0 : vector<8x13xf32> to vector<8x13xbf16>
    %c0_1 = arith.constant 0 : index
    %c0_2 = arith.constant 0 : index
    %2 = vector.load %arg2[%c0_1, %c0_2] : memref<13x256xbf16, #tpu.memory_space<vmem>>, vector<13x256xbf16>
    %cst = arith.constant dense<0.000000e+00> : vector<8x256xf32>
    %3 = tpu.matmul %1, %2, %cst {dimension_numbers = #tpu.dot_dimension_numbers<[1], [0], [0], [1], [0, 0, 1, 1], [], []>} : vector<8x13xbf16>, vector<13x256xbf16>, vector<8x256xf32> -> vector<8x256xf32>
    %c0_3 = arith.constant 0 : index
    %c0_4 = arith.constant 0 : index
    %4 = vector.load %arg3[%c0_3, %c0_4] : memref<1x256xf32, #tpu.memory_space<vmem>>, vector<1x256xf32>
    %5 = vector.broadcast %4 : vector<1x256xf32> to vector<8x256xf32>
    %6 = arith.addf %3, %5 : vector<8x256xf32>
    %cst_5 = arith.constant 0.000000e+00 : f32
    %7 = vector.broadcast %cst_5 : f32 to vector<8x256xf32>
    %8 = arith.maximumf %6, %7 : vector<8x256xf32>
    %9 = arith.truncf %8 : vector<8x256xf32> to vector<8x256xbf16>
    %c0_6 = arith.constant 0 : index
    %c0_7 = arith.constant 0 : index
    %10 = vector.load %arg4[%c0_6, %c0_7] : memref<256x256xbf16, #tpu.memory_space<vmem>>, vector<256x256xbf16>
    %cst_8 = arith.constant dense<0.000000e+00> : vector<8x256xf32>
    %11 = tpu.matmul %9, %10, %cst_8 {dimension_numbers = #tpu.dot_dimension_numbers<[1], [0], [0], [1], [0, 0, 1, 1], [], []>} : vector<8x256xbf16>, vector<256x256xbf16>, vector<8x256xf32> -> vector<8x256xf32>
    %c0_9 = arith.constant 0 : index
    %c0_10 = arith.constant 0 : index
    %12 = vector.load %arg5[%c0_9, %c0_10] : memref<1x256xf32, #tpu.memory_space<vmem>>, vector<1x256xf32>
    %13 = vector.broadcast %12 : vector<1x256xf32> to vector<8x256xf32>
    %14 = arith.addf %11, %13 : vector<8x256xf32>
    %cst_11 = arith.constant 0.000000e+00 : f32
    %15 = vector.broadcast %cst_11 : f32 to vector<8x256xf32>
    %16 = arith.maximumf %14, %15 : vector<8x256xf32>
    %17 = arith.truncf %16 : vector<8x256xf32> to vector<8x256xbf16>
    %c0_12 = arith.constant 0 : index
    %c0_13 = arith.constant 0 : index
    %18 = vector.load %arg6[%c0_12, %c0_13] : memref<256x256xbf16, #tpu.memory_space<vmem>>, vector<256x256xbf16>
    %cst_14 = arith.constant dense<0.000000e+00> : vector<8x256xf32>
    %19 = tpu.matmul %17, %18, %cst_14 {dimension_numbers = #tpu.dot_dimension_numbers<[1], [0], [0], [1], [0, 0, 1, 1], [], []>} : vector<8x256xbf16>, vector<256x256xbf16>, vector<8x256xf32> -> vector<8x256xf32>
    %c0_15 = arith.constant 0 : index
    %c0_16 = arith.constant 0 : index
    %20 = vector.load %arg7[%c0_15, %c0_16] : memref<1x256xf32, #tpu.memory_space<vmem>>, vector<1x256xf32>
    %21 = vector.broadcast %20 : vector<1x256xf32> to vector<8x256xf32>
    %22 = arith.addf %19, %21 : vector<8x256xf32>
    %cst_17 = arith.constant 0.000000e+00 : f32
    %23 = vector.broadcast %cst_17 : f32 to vector<8x256xf32>
    %24 = arith.maximumf %22, %23 : vector<8x256xf32>
    %25 = arith.truncf %24 : vector<8x256xf32> to vector<8x256xbf16>
    %c0_18 = arith.constant 0 : index
    %c0_19 = arith.constant 0 : index
    %26 = vector.load %arg8[%c0_18, %c0_19] : memref<256x128xbf16, #tpu.memory_space<vmem>>, vector<256x128xbf16>
    %cst_20 = arith.constant dense<0.000000e+00> : vector<8x128xf32>
    %27 = tpu.matmul %25, %26, %cst_20 {dimension_numbers = #tpu.dot_dimension_numbers<[1], [0], [0], [1], [0, 0, 1, 1], [], []>} : vector<8x256xbf16>, vector<256x128xbf16>, vector<8x128xf32> -> vector<8x128xf32>
    %c0_21 = arith.constant 0 : index
    %c0_22 = arith.constant 0 : index
    %28 = vector.load %arg9[%c0_21, %c0_22] : memref<1x128xf32, #tpu.memory_space<vmem>>, vector<1x128xf32>
    %29 = vector.broadcast %28 : vector<1x128xf32> to vector<8x128xf32>
    %30 = arith.addf %27, %29 : vector<8x128xf32>
    %31 = math.tanh %30 : vector<8x128xf32>
    %cst_23 = arith.constant 1.000000e+00 : f32
    %32 = vector.broadcast %cst_23 : f32 to vector<8x128xf32>
    %33 = arith.mulf %32, %31 : vector<8x128xf32>
    %c0_24 = arith.constant 0 : index
    %c0_25 = arith.constant 0 : index
    %34 = vector.load %arg10[%c0_24, %c0_25] : memref<8x128xf32, #tpu.memory_space<vmem>>, vector<8x128xf32>
    tpu.vector_store %arg10[%c0_24, %c0_25], %33 {strides = array<i32>} : memref<8x128xf32, #tpu.memory_space<vmem>>, vector<8x128xf32>,
    return
  }
  func.func @transform_0(%arg0: i32) -> (i32, i32) {
    %c0_i32 = arith.constant 0 : i32
    %c0_i32_0 = arith.constant 0 : i32
    return %arg0, %c0_i32 : i32, i32
  }
  func.func @transform_1(%arg0: i32) -> (i32, i32) {
    %c0_i32 = arith.constant 0 : i32
    %c0_i32_0 = arith.constant 0 : i32
    %c0_i32_1 = arith.constant 0 : i32
    return %c0_i32, %c0_i32_0 : i32, i32
  }
  func.func @transform_2(%arg0: i32) -> (i32, i32) {
    %c0_i32 = arith.constant 0 : i32
    %c0_i32_0 = arith.constant 0 : i32
    %c0_i32_1 = arith.constant 0 : i32
    return %c0_i32, %c0_i32_0 : i32, i32
  }
  func.func @transform_3(%arg0: i32) -> (i32, i32) {
    %c0_i32 = arith.constant 0 : i32
    %c0_i32_0 = arith.constant 0 : i32
    %c0_i32_1 = arith.constant 0 : i32
    return %c0_i32, %c0_i32_0 : i32, i32
  }
  func.func @transform_4(%arg0: i32) -> (i32, i32) {
    %c0_i32 = arith.constant 0 : i32
    %c0_i32_0 = arith.constant 0 : i32
    %c0_i32_1 = arith.constant 0 : i32
    return %c0_i32, %c0_i32_0 : i32, i32
  }
  func.func @transform_5(%arg0: i32) -> (i32, i32) {
    %c0_i32 = arith.constant 0 : i32
    %c0_i32_0 = arith.constant 0 : i32
    %c0_i32_1 = arith.constant 0 : i32
    return %c0_i32, %c0_i32_0 : i32, i32
  }
  func.func @transform_6(%arg0: i32) -> (i32, i32) {
    %c0_i32 = arith.constant 0 : i32
    %c0_i32_0 = arith.constant 0 : i32
    %c0_i32_1 = arith.constant 0 : i32
    return %c0_i32, %c0_i32_0 : i32, i32
  }
  func.func @transform_7(%arg0: i32) -> (i32, i32) {
    %c0_i32 = arith.constant 0 : i32
    %c0_i32_0 = arith.constant 0 : i32
    %c0_i32_1 = arith.constant 0 : i32
    return %c0_i32, %c0_i32_0 : i32, i32
  }
  func.func @transform_8(%arg0: i32) -> (i32, i32) {
    %c0_i32 = arith.constant 0 : i32
    %c0_i32_0 = arith.constant 0 : i32
    %c0_i32_1 = arith.constant 0 : i32
    return %c0_i32, %c0_i32_0 : i32, i32
  }
  func.func @transform_9(%arg0: i32) -> (i32, i32) {
    %c0_i32 = arith.constant 0 : i32
    %c0_i32_0 = arith.constant 0 : i32
    return %arg0, %c0_i32 : i32, i32
  }
}

</mosaic_0001>

<llo_original>
// kernel: tpu_custom_call.1
$region0: #{tpu_custom_call.1}
  #allocation0 [shape = 'u32[]', space=smem, size = 0x4, offset = 0x4, fixed_abs, tag = 'smem constant byte address 0x4 - core index']
  #allocation1 [shape = 'u32[72,128]{1,0:T(1,128)}', space=vmem, size = 0x9000, scoped, tag = 'internal scratch']
  %s0 = inlined_call_operand.hbm [shape: f32[8,13], index: 0, kind: input, shape index: {}]
  %s1 = inlined_call_operand.hbm [shape: bf16[13,256], index: 1, kind: input, shape index: {}]
  %s2 = inlined_call_operand.hbm [shape: f32[1,256], index: 2, kind: input, shape index: {}]
  %s3 = inlined_call_operand.hbm [shape: bf16[256,256], index: 3, kind: input, shape index: {}]
  %s4 = inlined_call_operand.vmem [shape: f32[1,256], index: 4, kind: input, shape index: {}]
  %s5 = inlined_call_operand.hbm [shape: bf16[256,256], index: 5, kind: input, shape index: {}]
  %s6 = inlined_call_operand.vmem [shape: f32[1,256], index: 6, kind: input, shape index: {}]
  %s7 = inlined_call_operand.hbm [shape: bf16[256,128], index: 7, kind: input, shape index: {}]
  %s8 = inlined_call_operand.vmem [shape: f32[1,128], index: 8, kind: input, shape index: {}]
  %s9 = inlined_call_operand.hbm [shape: f32[8,128], index: 9, kind: output, shape index: {}]
  %s10 = sld [smem:[#allocation0]]
  $region70: #{tpu_custom_call.1} parent=0
    _
  %s12 = ssub.s32 1, %s10
  %s13 = scalar_select 0, %s12, %s10
  $region1: #{tpu_custom_call.1} parent=0
    #allocation2 [shape = 'u8[4096]{0}', space=vmem, size = 0x1000, scoped, tag = 'input window, operand 0, single buffered']
    #allocation3 [shape = 's32[1]{0}', space=sflag, size = 0x4, scoped, tag = 'scoped memory for tpu_custom_call.1']
    #allocation4 [shape = 's32[1]{0}', space=sflag, size = 0x4, scoped, tag = 'scoped memory for tpu_custom_call.1']
    #allocation5 [shape = 'u8[8192]{0}', space=vmem, size = 0x2000, scoped, tag = 'input window, operand 1, single buffered']
    #allocation6 [shape = 's32[1]{0}', space=sflag, size = 0x4, scoped, tag = 'scoped memory for tpu_custom_call.1']
    #allocation7 [shape = 'u8[1024]{0}', space=vmem, size = 0x400, scoped, tag = 'input window, operand 2, single buffered']
    #allocation8 [shape = 'u8[131072]{0}', space=vmem, size = 0x20000, scoped, tag = 'input window, operand 3, single buffered']
    #allocation9 [shape = 's32[1]{0}', space=sflag, size = 0x4, scoped, tag = 'scoped memory for tpu_custom_call.1']
    #allocation10 [shape = 'u8[131072]{0}', space=vmem, size = 0x20000, scoped, tag = 'input window, operand 5, single buffered']
    #allocation11 [shape = 'u8[65536]{0}', space=vmem, size = 0x10000, scoped, tag = 'input window, operand 7, single buffered']
    #allocation12 [shape = 's32[1]{0}', space=sflag, size = 0x4, scoped, tag = 'scoped memory for tpu_custom_call.1']
    #allocation13 [shape = 'u8[4096]{0}', space=vmem, size = 0x1000, scoped, tag = 'output window, operand 0, single buffered']
    %14 = vsyncpa [#allocation3], 0
    %15 = vsyncpa [#allocation6], 0
    %16 = vsyncpa [#allocation9], 0
    %17 = vsyncpa [#allocation12], 0
    %18 = vsyncpa [#allocation4], 0
    // Predicated region
    $region2: #{tpu_custom_call.1} parent=1 // pred_check
      _
    $region3: #{tpu_custom_call.1} parent=1 // pred_check_branch
      %20 = sbr.rel (0) target = $region5
    $region4: #{tpu_custom_call.1} parent=1 // pred_region
      %22 = vsyncadd [#allocation3], 0
      %s24 = sshll.u32 %s0, 4
      %s25 = int_to_ptr.hbm [resolvable:$true] %s24
      %s26 = sshll.u32 [#allocation2], 4
      %s27 = int_to_ptr.vmem [resolvable:$true] %s26
      %29 = dma.hbm_to_vmem [thread:$0]  %s25, 128, %s27, [#allocation3]
    $region5: #{tpu_custom_call.1} parent=1 // pred_fallthru
      _
    // Predicated region
    $region6: #{tpu_custom_call.1} parent=1 // pred_check
      _
    $region7: #{tpu_custom_call.1} parent=1 // pred_check_branch
      %31 = sbr.rel (0) target = $region9
    $region8: #{tpu_custom_call.1} parent=1 // pred_region
      %33 = vsyncadd [#allocation6], 0
      %s34 = sshll.u32 %s1, 4
      %s35 = int_to_ptr.hbm [resolvable:$true] %s34
      %s36 = sshll.u32 [#allocation5], 4
      %s37 = int_to_ptr.vmem [resolvable:$true] %s36
      %42 = dma.hbm_to_vmem [thread:$0]  %s35, 256, %s37, [#allocation6], 128, 128, 8
    $region9: #{tpu_custom_call.1} parent=1 // pred_fallthru
      _
    // Predicated region
    $region10: #{tpu_custom_call.1} parent=1 // pred_check
      _
    $region11: #{tpu_custom_call.1} parent=1 // pred_check_branch
      %44 = sbr.rel (0) target = $region13
    $region12: #{tpu_custom_call.1} parent=1 // pred_region
      %46 = vsyncadd [#allocation6], 0
      %s48 = sshll.u32 %s2, 4
      %s49 = int_to_ptr.hbm [resolvable:$true] %s48
      %s50 = sshll.u32 [#allocation7], 4
      %s51 = int_to_ptr.vmem [resolvable:$true] %s50
      %53 = dma.hbm_to_vmem [thread:$0]  %s49, 32, %s51, [#allocation6]
    $region13: #{tpu_custom_call.1} parent=1 // pred_fallthru
      _
    // Predicated region
    $region14: #{tpu_custom_call.1} parent=1 // pred_check
      _
    $region15: #{tpu_custom_call.1} parent=1 // pred_check_branch
      %55 = sbr.rel (0) target = $region17
    $region16: #{tpu_custom_call.1} parent=1 // pred_region
      %57 = vsyncadd [#allocation9], 0
      %s58 = sshll.u32 %s3, 4
      %s59 = int_to_ptr.hbm [resolvable:$true] %s58
      %s60 = sshll.u32 [#allocation8], 4
      %s61 = int_to_ptr.vmem [resolvable:$true] %s60
      %66 = dma.hbm_to_vmem [thread:$0]  %s59, 4096, %s61, [#allocation9], 128, 128, 8
    $region17: #{tpu_custom_call.1} parent=1 // pred_fallthru
      _
    // Predicated region
    $region18: #{tpu_custom_call.1} parent=1 // pred_check
      _
    $region19: #{tpu_custom_call.1} parent=1 // pred_check_branch
      %68 = sbr.rel (0) target = $region21
    $region20: #{tpu_custom_call.1} parent=1 // pred_region
      _
    $region21: #{tpu_custom_call.1} parent=1 // pred_fallthru
      _
    // Predicated region
    $region22: #{tpu_custom_call.1} parent=1 // pred_check
      _
    $region23: #{tpu_custom_call.1} parent=1 // pred_check_branch
      %70 = sbr.rel (0) target = $region25
    $region24: #{tpu_custom_call.1} parent=1 // pred_region
      %72 = vsyncadd [#allocation9], 0
      %s73 = sshll.u32 %s5, 4
      %s74 = int_to_ptr.hbm [resolvable:$true] %s73
      %s75 = sshll.u32 [#allocation10], 4
      %s76 = int_to_ptr.vmem [resolvable:$true] %s75
      %81 = dma.hbm_to_vmem [thread:$0]  %s74, 4096, %s76, [#allocation9], 128, 128, 8
    $region25: #{tpu_custom_call.1} parent=1 // pred_fallthru
      _
    // Predicated region
    $region26: #{tpu_custom_call.1} parent=1 // pred_check
      _
    $region27: #{tpu_custom_call.1} parent=1 // pred_check_branch
      %83 = sbr.rel (0) target = $region29
    $region28: #{tpu_custom_call.1} parent=1 // pred_region
      _
    $region29: #{tpu_custom_call.1} parent=1 // pred_fallthru
      _
    // Predicated region
    $region30: #{tpu_custom_call.1} parent=1 // pred_check
      _
    $region31: #{tpu_custom_call.1} parent=1 // pred_check_branch
      %85 = sbr.rel (0) target = $region33
    $region32: #{tpu_custom_call.1} parent=1 // pred_region
      %87 = vsyncadd [#allocation12], 0
      %s88 = sshll.u32 %s7, 4
      %s89 = int_to_ptr.hbm [resolvable:$true] %s88
      %s90 = sshll.u32 [#allocation11], 4
      %s91 = int_to_ptr.vmem [resolvable:$true] %s90
      %96 = dma.hbm_to_vmem [thread:$0]  %s89, 2048, %s91, [#allocation12], 64, 64, 4
    $region33: #{tpu_custom_call.1} parent=1 // pred_fallthru
      _
    // Predicated region
    $region34: #{tpu_custom_call.1} parent=1 // pred_check
      _
    $region35: #{tpu_custom_call.1} parent=1 // pred_check_branch
      %98 = sbr.rel (0) target = $region37
    $region36: #{tpu_custom_call.1} parent=1 // pred_region
      _
    $region37: #{tpu_custom_call.1} parent=1 // pred_fallthru
      _
    // Predicated region
    $region38: #{tpu_custom_call.1} parent=1 // pred_check
      _
    $region39: #{tpu_custom_call.1} parent=1 // pred_check_branch
      %100 = sbr.rel (0) target = $region41
    $region40: #{tpu_custom_call.1} parent=1 // pred_region
      %102 = dma.done [#allocation3], 128
    $region41: #{tpu_custom_call.1} parent=1 // pred_fallthru
      _
    // Predicated region
    $region42: #{tpu_custom_call.1} parent=1 // pred_check
      _
    $region43: #{tpu_custom_call.1} parent=1 // pred_check_branch
      %104 = sbr.rel (0) target = $region45
    $region44: #{tpu_custom_call.1} parent=1 // pred_region
      %106 = dma.done [#allocation6], 256
    $region45: #{tpu_custom_call.1} parent=1 // pred_fallthru
      _
    // Predicated region
    $region46: #{tpu_custom_call.1} parent=1 // pred_check
      _
    $region47: #{tpu_custom_call.1} parent=1 // pred_check_branch
      %108 = sbr.rel (0) target = $region49
    $region48: #{tpu_custom_call.1} parent=1 // pred_region
      %110 = dma.done [#allocation6], 32
    $region49: #{tpu_custom_call.1} parent=1 // pred_fallthru
      _
    // Predicated region
    $region50: #{tpu_custom_call.1} parent=1 // pred_check
      _
    $region51: #{tpu_custom_call.1} parent=1 // pred_check_branch
      %112 = sbr.rel (0) target = $region53
    $region52: #{tpu_custom_call.1} parent=1 // pred_region
      %114 = dma.done [#allocation9], 4096
    $region53: #{tpu_custom_call.1} parent=1 // pred_fallthru
      _
    // Predicated region
    $region54: #{tpu_custom_call.1} parent=1 // pred_check
      _
    $region55: #{tpu_custom_call.1} parent=1 // pred_check_branch
      %116 = sbr.rel (0) target = $region57
    $region56: #{tpu_custom_call.1} parent=1 // pred_region
      %118 = dma.done [#allocation9], 4096
    $region57: #{tpu_custom_call.1} parent=1 // pred_fallthru
      _
    // Predicated region
    $region58: #{tpu_custom_call.1} parent=1 // pred_check
      _
    $region59: #{tpu_custom_call.1} parent=1 // pred_check_branch
      %120 = sbr.rel (0) target = $region61
    $region60: #{tpu_custom_call.1} parent=1 // pred_region
      %122 = dma.done [#allocation12], 2048
    $region61: #{tpu_custom_call.1} parent=1 // pred_fallthru
      _
    %v124 = vld [vmem:[#allocation2] sm:$0xff]
    %v125 = vpack.c.bf16 %v124, %v124
    %v126 = vld [vmem:[#allocation5] sm:$0xff]
    %v127 = vld [vmem:[#allocation5 + $0x8] sm:$0x77]
    %v128 = vld [vmem:[#allocation7] sm:$0x3]
    %v130 = vperm.slane %v128, 0
    %v131 = vperm.slane %v128, 1
    %v136 = vunpack.c.l.b16 %v126
    %v137 = vunpack.c.h.b16 %v126
    %v138 = vunpack.c.l.b16 %v127
    %v139 = vunpack.c.h.b16 %v127
    %v140 = vpack.c.b16 %v138, %v136
    %v141 = vpack.c.b16 %v139, %v137
    %vm142 = vcmask 105472
    %v144 = vsel %vm142, %v125, 0
    %vm146 = vcmask 1045504
    %vm147 = vcmask 1046528
    %v148 = vsel %vm146, 4294967295, 65535
    %v149 = vsel %vm147, %v148, 0
    %v151 = vand.u32 %v140, %v149
    %v154 = vand.u32 %v141, %v149
    %156 = vmatpush.bf16.msra.mxu0 0
    %157 = vmatpush.bf16.msra.mxu0 0
    %158 = vmatpush.bf16.msra.mxu0 0
    %159 = vmatpush.bf16.msra.mxu0 0
    %160 = vmatpush.bf16.msra.mxu0 0
    %161 = vmatpush.bf16.msra.mxu0 0
    %162 = vmatpush.bf16.msra.mxu0 0
    %163 = vmatpush.bf16.msra.mxu0 %v151
    %164 = vmatmul.bf16.gmra.mxu0 %v144
    %v165 = vpop.f32.mrf.mxu0
    %v166 = vadd.f32 %v130, %v165
    %v167 = vpop.f32.mrf.mxu0
    %168 = vdwg.mxu0
    %169 = vmatpush.bf16.msra.mxu0 0
    %170 = vmatpush.bf16.msra.mxu0 0
    %171 = vmatpush.bf16.msra.mxu0 0
    %172 = vmatpush.bf16.msra.mxu0 0
    %173 = vmatpush.bf16.msra.mxu0 0
    %174 = vmatpush.bf16.msra.mxu0 0
    %175 = vmatpush.bf16.msra.mxu0 0
    %176 = vmatpush.bf16.msra.mxu0 %v154
    %177 = vmatmul.bf16.gmra.mxu0 %v144
    %v178 = vpop.f32.mrf.mxu0
    %v179 = vadd.f32 %v131, %v178
    %v180 = vpop.f32.mrf.mxu0
    %181 = vdwg.mxu0
    %v182 = vmax.f32 %v166, 0.0
    %v183 = vmax.f32 %v179, 0.0
    %v184 = vpack.c.bf16 %v182, %v182
    %v185 = vpack.c.bf16 %v183, %v183
    %v186 = vld [vmem:[#allocation8] sm:$0xff]
    %v187 = vld [vmem:[#allocation8 + $0x8] sm:$0xff]
    %v188 = vld [vmem:[#allocation8 + $0x10] sm:$0xff]
    %v189 = vld [vmem:[#allocation8 + $0x18] sm:$0xff]
    %v190 = vld [vmem:[#allocation8 + $0x20] sm:$0xff]
    %v191 = vld [vmem:[#allocation8 + $0x28] sm:$0xff]
    %v192 = vld [vmem:[#allocation8 + $0x30] sm:$0xff]
    %v193 = vld [vmem:[#allocation8 + $0x38] sm:$0xff]
    %v194 = vld [vmem:[#allocation8 + $0x40] sm:$0xff]
    %v195 = vld [vmem:[#allocation8 + $0x48] sm:$0xff]
    %v196 = vld [vmem:[#allocation8 + $0x50] sm:$0xff]
    %v197 = vld [vmem:[#allocation8 + $0x58] sm:$0xff]
    %v198 = vld [vmem:[#allocation8 + $0x60] sm:$0xff]
    %v199 = vld [vmem:[#allocation8 + $0x68] sm:$0xff]
    %v200 = vld [vmem:[#allocation8 + $0x70] sm:$0xff]
    %v201 = vld [vmem:[#allocation8 + $0x78] sm:$0xff]
    %v202 = vld [vmem:[#allocation8 + $0x80] sm:$0xff]
    %v203 = vld [vmem:[#allocation8 + $0x88] sm:$0xff]
    %v204 = vld [vmem:[#allocation8 + $0x90] sm:$0xff]
    %v205 = vld [vmem:[#allocation8 + $0x98] sm:$0xff]
    %v206 = vld [vmem:[#allocation8 + $0xa0] sm:$0xff]
    %v207 = vld [vmem:[#allocation8 + $0xa8] sm:$0xff]
    %v208 = vld [vmem:[#allocation8 + $0xb0] sm:$0xff]
    %v209 = vld [vmem:[#allocation8 + $0xb8] sm:$0xff]
    %v210 = vld [vmem:[#allocation8 + $0xc0] sm:$0xff]
    %v211 = vld [vmem:[#allocation8 + $0xc8] sm:$0xff]
    %v212 = vld [vmem:[#allocation8 + $0xd0] sm:$0xff]
    %v213 = vld [vmem:[#allocation8 + $0xd8] sm:$0xff]
    %v214 = vld [vmem:[#allocation8 + $0xe0] sm:$0xff]
    %v215 = vld [vmem:[#allocation8 + $0xe8] sm:$0xff]
    %v216 = vld [vmem:[#allocation8 + $0xf0] sm:$0xff]
    %v217 = vld [vmem:[#allocation8 + $0xf8] sm:$0xff]
    %v218 = vld [vmem:[%s4] sm:$0x3]
    %v220 = vperm.slane %v218, 0
    %v221 = vperm.slane %v218, 1
    %v256 = vunpack.c.l.b16 %v186
    %v257 = vunpack.c.h.b16 %v186
    %v258 = vunpack.c.l.b16 %v187
    %v259 = vunpack.c.h.b16 %v187
    %v260 = vunpack.c.l.b16 %v188
    %v261 = vunpack.c.h.b16 %v188
    %v262 = vunpack.c.l.b16 %v189
    %v263 = vunpack.c.h.b16 %v189
    %v264 = vunpack.c.l.b16 %v190
    %v265 = vunpack.c.h.b16 %v190
    %v266 = vunpack.c.l.b16 %v191
    %v267 = vunpack.c.h.b16 %v191
    %v268 = vunpack.c.l.b16 %v192
    %v269 = vunpack.c.h.b16 %v192
    %v270 = vunpack.c.l.b16 %v193
    %v271 = vunpack.c.h.b16 %v193
    %v272 = vunpack.c.l.b16 %v194
    %v273 = vunpack.c.h.b16 %v194
    %v274 = vunpack.c.l.b16 %v195
    %v275 = vunpack.c.h.b16 %v195
    %v276 = vunpack.c.l.b16 %v196
    %v277 = vunpack.c.h.b16 %v196
    %v278 = vunpack.c.l.b16 %v197
    %v279 = vunpack.c.h.b16 %v197
    %v280 = vunpack.c.l.b16 %v198
    %v281 = vunpack.c.h.b16 %v198
    %v282 = vunpack.c.l.b16 %v199
    %v283 = vunpack.c.h.b16 %v199
    %v284 = vunpack.c.l.b16 %v200
    %v285 = vunpack.c.h.b16 %v200
    %v286 = vunpack.c.l.b16 %v201
    %v287 = vunpack.c.h.b16 %v201
    %v288 = vunpack.c.l.b16 %v202
    %v289 = vunpack.c.h.b16 %v202
    %v290 = vunpack.c.l.b16 %v203
    %v291 = vunpack.c.h.b16 %v203
    %v292 = vunpack.c.l.b16 %v204
    %v293 = vunpack.c.h.b16 %v204
    %v294 = vunpack.c.l.b16 %v205
    %v295 = vunpack.c.h.b16 %v205
    %v296 = vunpack.c.l.b16 %v206
    %v297 = vunpack.c.h.b16 %v206
    %v298 = vunpack.c.l.b16 %v207
    %v299 = vunpack.c.h.b16 %v207
    %v300 = vunpack.c.l.b16 %v208
    %v301 = vunpack.c.h.b16 %v208
    %v302 = vunpack.c.l.b16 %v209
    %v303 = vunpack.c.h.b16 %v209
    %v304 = vunpack.c.l.b16 %v210
    %v305 = vunpack.c.h.b16 %v210
    %v306 = vunpack.c.l.b16 %v211
    %v307 = vunpack.c.h.b16 %v211
    %v308 = vunpack.c.l.b16 %v212
    %v309 = vunpack.c.h.b16 %v212
    %v310 = vunpack.c.l.b16 %v213
    %v311 = vunpack.c.h.b16 %v213
    %v312 = vunpack.c.l.b16 %v214
    %v313 = vunpack.c.h.b16 %v214
    %v314 = vunpack.c.l.b16 %v215
    %v315 = vunpack.c.h.b16 %v215
    %v316 = vunpack.c.l.b16 %v216
    %v317 = vunpack.c.h.b16 %v216
    %v318 = vunpack.c.l.b16 %v217
    %v319 = vunpack.c.h.b16 %v217
    %v320 = vpack.c.b16 %v258, %v256
    %v321 = vpack.c.b16 %v259, %v257
    %v322 = vpack.c.b16 %v262, %v260
    %v323 = vpack.c.b16 %v263, %v261
    %v324 = vpack.c.b16 %v266, %v264
    %v325 = vpack.c.b16 %v267, %v265
    %v326 = vpack.c.b16 %v270, %v268
    %v327 = vpack.c.b16 %v271, %v269
    %v328 = vpack.c.b16 %v274, %v272
    %v329 = vpack.c.b16 %v275, %v273
    %v330 = vpack.c.b16 %v278, %v276
    %v331 = vpack.c.b16 %v279, %v277
    %v332 = vpack.c.b16 %v282, %v280
    %v333 = vpack.c.b16 %v283, %v281
    %v334 = vpack.c.b16 %v286, %v284
    %v335 = vpack.c.b16 %v287, %v285
    %v336 = vpack.c.b16 %v290, %v288
    %v337 = vpack.c.b16 %v291, %v289
    %v338 = vpack.c.b16 %v294, %v292
    %v339 = vpack.c.b16 %v295, %v293
    %v340 = vpack.c.b16 %v298, %v296
    %v341 = vpack.c.b16 %v299, %v297
    %v342 = vpack.c.b16 %v302, %v300
    %v343 = vpack.c.b16 %v303, %v301
    %v344 = vpack.c.b16 %v306, %v304
    %v345 = vpack.c.b16 %v307, %v305
    %v346 = vpack.c.b16 %v310, %v308
    %v347 = vpack.c.b16 %v311, %v309
    %v348 = vpack.c.b16 %v314, %v312
    %v349 = vpack.c.b16 %v315, %v313
    %v350 = vpack.c.b16 %v318, %v316
    %v351 = vpack.c.b16 %v319, %v317
    %384 = vmatpush.bf16.msra.mxu0 %v334
    %385 = vmatpush.bf16.msra.mxu0 %v332
    %386 = vmatpush.bf16.msra.mxu0 %v330
    %387 = vmatpush.bf16.msra.mxu0 %v328
    %388 = vmatpush.bf16.msra.mxu0 %v326
    %389 = vmatpush.bf16.msra.mxu0 %v324
    %390 = vmatpush.bf16.msra.mxu0 %v322
    %391 = vmatpush.bf16.msra.mxu0 %v320
    %392 = vmatmul.bf16.gmra.mxu0 %v184
    %v393 = vpop.f32.mrf.mxu0
    %v394 = vadd.f32 %v220, %v393
    %v395 = vpop.f32.mrf.mxu0
    %396 = vdwg.mxu0
    %397 = vmatpush.bf16.msra.mxu0 %v350
    %398 = vmatpush.bf16.msra.mxu0 %v348
    %399 = vmatpush.bf16.msra.mxu0 %v346
    %400 = vmatpush.bf16.msra.mxu0 %v344
    %401 = vmatpush.bf16.msra.mxu0 %v342
    %402 = vmatpush.bf16.msra.mxu0 %v340
    %403 = vmatpush.bf16.msra.mxu0 %v338
    %404 = vmatpush.bf16.msra.mxu0 %v336
    %405 = vmatmul.bf16.gmra.mxu0 %v185
    %v406 = vpop.f32.mrf.mxu0
    %v407 = vadd.f32 %v394, %v406
    %v408 = vpop.f32.mrf.mxu0
    %409 = vdwg.mxu0
    %410 = vmatpush.bf16.msra.mxu0 %v335
    %411 = vmatpush.bf16.msra.mxu0 %v333
    %412 = vmatpush.bf16.msra.mxu0 %v331
    %413 = vmatpush.bf16.msra.mxu0 %v329
    %414 = vmatpush.bf16.msra.mxu0 %v327
    %415 = vmatpush.bf16.msra.mxu0 %v325
    %416 = vmatpush.bf16.msra.mxu0 %v323
    %417 = vmatpush.bf16.msra.mxu0 %v321
    %418 = vmatmul.bf16.gmra.mxu0 %v184
    %v419 = vpop.f32.mrf.mxu0
    %v420 = vadd.f32 %v221, %v419
    %v421 = vpop.f32.mrf.mxu0
    %422 = vdwg.mxu0
    %423 = vmatpush.bf16.msra.mxu0 %v351
    %424 = vmatpush.bf16.msra.mxu0 %v349
    %425 = vmatpush.bf16.msra.mxu0 %v347
    %426 = vmatpush.bf16.msra.mxu0 %v345
    %427 = vmatpush.bf16.msra.mxu0 %v343
    %428 = vmatpush.bf16.msra.mxu0 %v341
    %429 = vmatpush.bf16.msra.mxu0 %v339
    %430 = vmatpush.bf16.msra.mxu0 %v337
    %431 = vmatmul.bf16.gmra.mxu0 %v185
    %v432 = vpop.f32.mrf.mxu0
    %v433 = vadd.f32 %v420, %v432
    %v434 = vpop.f32.mrf.mxu0
    %435 = vdwg.mxu0
    %v436 = vmax.f32 %v407, 0.0
    %v437 = vmax.f32 %v433, 0.0
    %v438 = vpack.c.bf16 %v436, %v436
    %v439 = vpack.c.bf16 %v437, %v437
    %v440 = vld [vmem:[#allocation10] sm:$0xff]
    %v441 = vld [vmem:[#allocation10 + $0x8] sm:$0xff]
    %v442 = vld [vmem:[#allocation10 + $0x10] sm:$0xff]
    %v443 = vld [vmem:[#allocation10 + $0x18] sm:$0xff]
    %v444 = vld [vmem:[#allocation10 + $0x20] sm:$0xff]
    %v445 = vld [vmem:[#allocation10 + $0x28] sm:$0xff]
    %v446 = vld [vmem:[#allocation10 + $0x30] sm:$0xff]
    %v447 = vld [vmem:[#allocation10 + $0x38] sm:$0xff]
    %v448 = vld [vmem:[#allocation10 + $0x40] sm:$0xff]
    %v449 = vld [vmem:[#allocation10 + $0x48] sm:$0xff]
    %v450 = vld [vmem:[#allocation10 + $0x50] sm:$0xff]
    %v451 = vld [vmem:[#allocation10 + $0x58] sm:$0xff]
    %v452 = vld [vmem:[#allocation10 + $0x60] sm:$0xff]
    %v453 = vld [vmem:[#allocation10 + $0x68] sm:$0xff]
    %v454 = vld [vmem:[#allocation10 + $0x70] sm:$0xff]
    %v455 = vld [vmem:[#allocation10 + $0x78] sm:$0xff]
    %v456 = vld [vmem:[#allocation10 + $0x80] sm:$0xff]
    %v457 = vld [vmem:[#allocation10 + $0x88] sm:$0xff]
    %v458 = vld [vmem:[#allocation10 + $0x90] sm:$0xff]
    %v459 = vld [vmem:[#allocation10 + $0x98] sm:$0xff]
    %v460 = vld [vmem:[#allocation10 + $0xa0] sm:$0xff]
    %v461 = vld [vmem:[#allocation10 + $0xa8] sm:$0xff]
    %v462 = vld [vmem:[#allocation10 + $0xb0] sm:$0xff]
    %v463 = vld [vmem:[#allocation10 + $0xb8] sm:$0xff]
    %v464 = vld [vmem:[#allocation10 + $0xc0] sm:$0xff]
    %v465 = vld [vmem:[#allocation10 + $0xc8] sm:$0xff]
    %v466 = vld [vmem:[#allocation10 + $0xd0] sm:$0xff]
    %v467 = vld [vmem:[#allocation10 + $0xd8] sm:$0xff]
    %v468 = vld [vmem:[#allocation10 + $0xe0] sm:$0xff]
    %v469 = vld [vmem:[#allocation10 + $0xe8] sm:$0xff]
    %v470 = vld [vmem:[#allocation10 + $0xf0] sm:$0xff]
    %v471 = vld [vmem:[#allocation10 + $0xf8] sm:$0xff]
    %v472 = vld [vmem:[%s6] sm:$0x3]
    %v474 = vperm.slane %v472, 0
    %v475 = vperm.slane %v472, 1
    %v510 = vunpack.c.l.b16 %v440
    %v511 = vunpack.c.h.b16 %v440
    %v512 = vunpack.c.l.b16 %v441
    %v513 = vunpack.c.h.b16 %v441
    %v514 = vunpack.c.l.b16 %v442
    %v515 = vunpack.c.h.b16 %v442
    %v516 = vunpack.c.l.b16 %v443
    %v517 = vunpack.c.h.b16 %v443
    %v518 = vunpack.c.l.b16 %v444
    %v519 = vunpack.c.h.b16 %v444
    %v520 = vunpack.c.l.b16 %v445
    %v521 = vunpack.c.h.b16 %v445
    %v522 = vunpack.c.l.b16 %v446
    %v523 = vunpack.c.h.b16 %v446
    %v524 = vunpack.c.l.b16 %v447
    %v525 = vunpack.c.h.b16 %v447
    %v526 = vunpack.c.l.b16 %v448
    %v527 = vunpack.c.h.b16 %v448
    %v528 = vunpack.c.l.b16 %v449
    %v529 = vunpack.c.h.b16 %v449
    %v530 = vunpack.c.l.b16 %v450
    %v531 = vunpack.c.h.b16 %v450
    %v532 = vunpack.c.l.b16 %v451
    %v533 = vunpack.c.h.b16 %v451
    %v534 = vunpack.c.l.b16 %v452
    %v535 = vunpack.c.h.b16 %v452
    %v536 = vunpack.c.l.b16 %v453
    %v537 = vunpack.c.h.b16 %v453
    %v538 = vunpack.c.l.b16 %v454
    %v539 = vunpack.c.h.b16 %v454
    %v540 = vunpack.c.l.b16 %v455
    %v541 = vunpack.c.h.b16 %v455
    %v542 = vunpack.c.l.b16 %v456
    %v543 = vunpack.c.h.b16 %v456
    %v544 = vunpack.c.l.b16 %v457
    %v545 = vunpack.c.h.b16 %v457
    %v546 = vunpack.c.l.b16 %v458
    %v547 = vunpack.c.h.b16 %v458
    %v548 = vunpack.c.l.b16 %v459
    %v549 = vunpack.c.h.b16 %v459
    %v550 = vunpack.c.l.b16 %v460
    %v551 = vunpack.c.h.b16 %v460
    %v552 = vunpack.c.l.b16 %v461
    %v553 = vunpack.c.h.b16 %v461
    %v554 = vunpack.c.l.b16 %v462
    %v555 = vunpack.c.h.b16 %v462
    %v556 = vunpack.c.l.b16 %v463
    %v557 = vunpack.c.h.b16 %v463
    %v558 = vunpack.c.l.b16 %v464
    %v559 = vunpack.c.h.b16 %v464
    %v560 = vunpack.c.l.b16 %v465
    %v561 = vunpack.c.h.b16 %v465
    %v562 = vunpack.c.l.b16 %v466
    %v563 = vunpack.c.h.b16 %v466
    %v564 = vunpack.c.l.b16 %v467
    %v565 = vunpack.c.h.b16 %v467
    %v566 = vunpack.c.l.b16 %v468
    %v567 = vunpack.c.h.b16 %v468
    %v568 = vunpack.c.l.b16 %v469
    %v569 = vunpack.c.h.b16 %v469
    %v570 = vunpack.c.l.b16 %v470
    %v571 = vunpack.c.h.b16 %v470
    %v572 = vunpack.c.l.b16 %v471
    %v573 = vunpack.c.h.b16 %v471
    %v574 = vpack.c.b16 %v512, %v510
    %v575 = vpack.c.b16 %v513, %v511
    %v576 = vpack.c.b16 %v516, %v514
    %v577 = vpack.c.b16 %v517, %v515
    %v578 = vpack.c.b16 %v520, %v518
    %v579 = vpack.c.b16 %v521, %v519
    %v580 = vpack.c.b16 %v524, %v522
    %v581 = vpack.c.b16 %v525, %v523
    %v582 = vpack.c.b16 %v528, %v526
    %v583 = vpack.c.b16 %v529, %v527
    %v584 = vpack.c.b16 %v532, %v530
    %v585 = vpack.c.b16 %v533, %v531
    %v586 = vpack.c.b16 %v536, %v534
    %v587 = vpack.c.b16 %v537, %v535
    %v588 = vpack.c.b16 %v540, %v538
    %v589 = vpack.c.b16 %v541, %v539
    %v590 = vpack.c.b16 %v544, %v542
    %v591 = vpack.c.b16 %v545, %v543
    %v592 = vpack.c.b16 %v548, %v546
    %v593 = vpack.c.b16 %v549, %v547
    %v594 = vpack.c.b16 %v552, %v550
    %v595 = vpack.c.b16 %v553, %v551
    %v596 = vpack.c.b16 %v556, %v554
    %v597 = vpack.c.b16 %v557, %v555
    %v598 = vpack.c.b16 %v560, %v558
    %v599 = vpack.c.b16 %v561, %v559
    %v600 = vpack.c.b16 %v564, %v562
    %v601 = vpack.c.b16 %v565, %v563
    %v602 = vpack.c.b16 %v568, %v566
    %v603 = vpack.c.b16 %v569, %v567
    %v604 = vpack.c.b16 %v572, %v570
    %v605 = vpack.c.b16 %v573, %v571
    %638 = vmatpush.bf16.msra.mxu0 %v588
    %639 = vmatpush.bf16.msra.mxu0 %v586
    %640 = vmatpush.bf16.msra.mxu0 %v584
    %641 = vmatpush.bf16.msra.mxu0 %v582
    %642 = vmatpush.bf16.msra.mxu0 %v580
    %643 = vmatpush.bf16.msra.mxu0 %v578
    %644 = vmatpush.bf16.msra.mxu0 %v576
    %645 = vmatpush.bf16.msra.mxu0 %v574
    %646 = vmatmul.bf16.gmra.mxu0 %v438
    %v647 = vpop.f32.mrf.mxu0
    %v648 = vadd.f32 %v474, %v647
    %v649 = vpop.f32.mrf.mxu0
    %650 = vdwg.mxu0
    %651 = vmatpush.bf16.msra.mxu0 %v604
    %652 = vmatpush.bf16.msra.mxu0 %v602
    %653 = vmatpush.bf16.msra.mxu0 %v600
    %654 = vmatpush.bf16.msra.mxu0 %v598
    %655 = vmatpush.bf16.msra.mxu0 %v596
    %656 = vmatpush.bf16.msra.mxu0 %v594
    %657 = vmatpush.bf16.msra.mxu0 %v592
    %658 = vmatpush.bf16.msra.mxu0 %v590
    %659 = vmatmul.bf16.gmra.mxu0 %v439
    %v660 = vpop.f32.mrf.mxu0
    %v661 = vadd.f32 %v648, %v660
    %v662 = vpop.f32.mrf.mxu0
    %663 = vdwg.mxu0
    %664 = vmatpush.bf16.msra.mxu0 %v589
    %665 = vmatpush.bf16.msra.mxu0 %v587
    %666 = vmatpush.bf16.msra.mxu0 %v585
    %667 = vmatpush.bf16.msra.mxu0 %v583
    %668 = vmatpush.bf16.msra.mxu0 %v581
    %669 = vmatpush.bf16.msra.mxu0 %v579
    %670 = vmatpush.bf16.msra.mxu0 %v577
    %671 = vmatpush.bf16.msra.mxu0 %v575
    %672 = vmatmul.bf16.gmra.mxu0 %v438
    %v673 = vpop.f32.mrf.mxu0
    %v674 = vadd.f32 %v475, %v673
    %v675 = vpop.f32.mrf.mxu0
    %676 = vdwg.mxu0
    %677 = vmatpush.bf16.msra.mxu0 %v605
    %678 = vmatpush.bf16.msra.mxu0 %v603
    %679 = vmatpush.bf16.msra.mxu0 %v601
    %680 = vmatpush.bf16.msra.mxu0 %v599
    %681 = vmatpush.bf16.msra.mxu0 %v597
    %682 = vmatpush.bf16.msra.mxu0 %v595
    %683 = vmatpush.bf16.msra.mxu0 %v593
    %684 = vmatpush.bf16.msra.mxu0 %v591
    %685 = vmatmul.bf16.gmra.mxu0 %v439
    %v686 = vpop.f32.mrf.mxu0
    %v687 = vadd.f32 %v674, %v686
    %v688 = vpop.f32.mrf.mxu0
    %689 = vdwg.mxu0
    %v690 = vmax.f32 %v661, 0.0
    %v691 = vmax.f32 %v687, 0.0
    %v692 = vpack.c.bf16 %v690, %v690
    %v693 = vpack.c.bf16 %v691, %v691
    %v694 = vld [vmem:[#allocation11] sm:$0xf]
    %v695 = vld [vmem:[#allocation11 + $0x4] sm:$0xf]
    %v696 = vld [vmem:[#allocation11 + $0x8] sm:$0xf]
    %v697 = vld [vmem:[#allocation11 + $0xc] sm:$0xf]
    %v698 = vld [vmem:[#allocation11 + $0x10] sm:$0xf]
    %v699 = vld [vmem:[#allocation11 + $0x14] sm:$0xf]
    %v700 = vld [vmem:[#allocation11 + $0x18] sm:$0xf]
    %v701 = vld [vmem:[#allocation11 + $0x1c] sm:$0xf]
    %v702 = vld [vmem:[#allocation11 + $0x20] sm:$0xf]
    %v703 = vld [vmem:[#allocation11 + $0x24] sm:$0xf]
    %v704 = vld [vmem:[#allocation11 + $0x28] sm:$0xf]
    %v705 = vld [vmem:[#allocation11 + $0x2c] sm:$0xf]
    %v706 = vld [vmem:[#allocation11 + $0x30] sm:$0xf]
    %v707 = vld [vmem:[#allocation11 + $0x34] sm:$0xf]
    %v708 = vld [vmem:[#allocation11 + $0x38] sm:$0xf]
    %v709 = vld [vmem:[#allocation11 + $0x3c] sm:$0xf]
    %v710 = vld [vmem:[#allocation11 + $0x40] sm:$0xf]
    %v711 = vld [vmem:[#allocation11 + $0x44] sm:$0xf]
    %v712 = vld [vmem:[#allocation11 + $0x48] sm:$0xf]
    %v713 = vld [vmem:[#allocation11 + $0x4c] sm:$0xf]
    %v714 = vld [vmem:[#allocation11 + $0x50] sm:$0xf]
    %v715 = vld [vmem:[#allocation11 + $0x54] sm:$0xf]
    %v716 = vld [vmem:[#allocation11 + $0x58] sm:$0xf]
    %v717 = vld [vmem:[#allocation11 + $0x5c] sm:$0xf]
    %v718 = vld [vmem:[#allocation11 + $0x60] sm:$0xf]
    %v719 = vld [vmem:[#allocation11 + $0x64] sm:$0xf]
    %v720 = vld [vmem:[#allocation11 + $0x68] sm:$0xf]
    %v721 = vld [vmem:[#allocation11 + $0x6c] sm:$0xf]
    %v722 = vld [vmem:[#allocation11 + $0x70] sm:$0xf]
    %v723 = vld [vmem:[#allocation11 + $0x74] sm:$0xf]
    %v724 = vld [vmem:[#allocation11 + $0x78] sm:$0xf]
    %v725 = vld [vmem:[#allocation11 + $0x7c] sm:$0xf]
    %v726 = vld [vmem:[%s8] sm:$0x1]
    %v728 = vperm.slane %v726, 0
    %v762 = vunpack.c.l.b16 %v694
    %v763 = vunpack.c.l.b16 %v695
    %v764 = vunpack.c.l.b16 %v696
    %v765 = vunpack.c.l.b16 %v697
    %v766 = vunpack.c.l.b16 %v698
    %v767 = vunpack.c.l.b16 %v699
    %v768 = vunpack.c.l.b16 %v700
    %v769 = vunpack.c.l.b16 %v701
    %v770 = vunpack.c.l.b16 %v702
    %v771 = vunpack.c.l.b16 %v703
    %v772 = vunpack.c.l.b16 %v704
    %v773 = vunpack.c.l.b16 %v705
    %v774 = vunpack.c.l.b16 %v706
    %v775 = vunpack.c.l.b16 %v707
    %v776 = vunpack.c.l.b16 %v708
    %v777 = vunpack.c.l.b16 %v709
    %v778 = vunpack.c.l.b16 %v710
    %v779 = vunpack.c.l.b16 %v711
    %v780 = vunpack.c.l.b16 %v712
    %v781 = vunpack.c.l.b16 %v713
    %v782 = vunpack.c.l.b16 %v714
    %v783 = vunpack.c.l.b16 %v715
    %v784 = vunpack.c.l.b16 %v716
    %v785 = vunpack.c.l.b16 %v717
    %v786 = vunpack.c.l.b16 %v718
    %v787 = vunpack.c.l.b16 %v719
    %v788 = vunpack.c.l.b16 %v720
    %v789 = vunpack.c.l.b16 %v721
    %v790 = vunpack.c.l.b16 %v722
    %v791 = vunpack.c.l.b16 %v723
    %v792 = vunpack.c.l.b16 %v724
    %v793 = vunpack.c.l.b16 %v725
    %v794 = vpack.c.b16 %v763, %v762
    %v795 = vpack.c.b16 %v765, %v764
    %v796 = vpack.c.b16 %v767, %v766
    %v797 = vpack.c.b16 %v769, %v768
    %v798 = vpack.c.b16 %v771, %v770
    %v799 = vpack.c.b16 %v773, %v772
    %v800 = vpack.c.b16 %v775, %v774
    %v801 = vpack.c.b16 %v777, %v776
    %v802 = vpack.c.b16 %v779, %v778
    %v803 = vpack.c.b16 %v781, %v780
    %v804 = vpack.c.b16 %v783, %v782
    %v805 = vpack.c.b16 %v785, %v784
    %v806 = vpack.c.b16 %v787, %v786
    %v807 = vpack.c.b16 %v789, %v788
    %v808 = vpack.c.b16 %v791, %v790
    %v809 = vpack.c.b16 %v793, %v792
    %826 = vmatpush.bf16.msra.mxu0 %v801
    %827 = vmatpush.bf16.msra.mxu0 %v800
    %828 = vmatpush.bf16.msra.mxu0 %v799
    %829 = vmatpush.bf16.msra.mxu0 %v798
    %830 = vmatpush.bf16.msra.mxu0 %v797
    %831 = vmatpush.bf16.msra.mxu0 %v796
    %832 = vmatpush.bf16.msra.mxu0 %v795
    %833 = vmatpush.bf16.msra.mxu0 %v794
    %834 = vmatmul.bf16.gmra.mxu0 %v692
    %v835 = vpop.f32.mrf.mxu0
    %v836 = vadd.f32 %v728, %v835
    %v837 = vpop.f32.mrf.mxu0
    %838 = vdwg.mxu0
    %839 = vmatpush.bf16.msra.mxu0 %v809
    %840 = vmatpush.bf16.msra.mxu0 %v808
    %841 = vmatpush.bf16.msra.mxu0 %v807
    %842 = vmatpush.bf16.msra.mxu0 %v806
    %843 = vmatpush.bf16.msra.mxu0 %v805
    %844 = vmatpush.bf16.msra.mxu0 %v804
    %845 = vmatpush.bf16.msra.mxu0 %v803
    %846 = vmatpush.bf16.msra.mxu0 %v802
    %847 = vmatmul.bf16.gmra.mxu0 %v693
    %v848 = vpop.f32.mrf.mxu0
    %v849 = vadd.f32 %v836, %v848
    %v850 = vpop.f32.mrf.mxu0
    %851 = vdwg.mxu0
    %v852 = vtanh.pop %v849
    %853 = vst [vmem:[#allocation13] sm:$0xff] %v852
    // Predicated region
    $region62: #{tpu_custom_call.1} parent=1 // pred_check
      _
    $region63: #{tpu_custom_call.1} parent=1 // pred_check_branch
      %855 = sbr.rel (0) target = $region65
    $region64: #{tpu_custom_call.1} parent=1 // pred_region
      %857 = vsyncadd [#allocation4], 0
      %s859 = sshll.u32 [#allocation13], 4
      %s860 = int_to_ptr.vmem [resolvable:$true] %s859
      %s861 = sshll.u32 %s9, 4
      %s862 = int_to_ptr.hbm [resolvable:$true] %s861
      %864 = dma.vmem_to_hbm [thread:$0]  %s860, 128, %s862, [#allocation4]
    $region65: #{tpu_custom_call.1} parent=1 // pred_fallthru
      _
    // Predicated region
    $region66: #{tpu_custom_call.1} parent=1 // pred_check
      _
    $region67: #{tpu_custom_call.1} parent=1 // pred_check_branch
      %866 = sbr.rel (0) target = $region69
    $region68: #{tpu_custom_call.1} parent=1 // pred_region
      %868 = dma.done [#allocation4], 128
    $region69: #{tpu_custom_call.1} parent=1 // pred_fallthru
      _
    %869 = vsyncpa [#allocation3], 1
    %870 = vsyncpa [#allocation6], 1
    %871 = vsyncpa [#allocation9], 1
    %872 = vsyncpa [#allocation12], 1
    %873 = vsyncpa [#allocation4], 1

</llo_original>
